<compile_context>
chip_gen: v7x
topology: tpu7x:2x2x1
jax: 0.10.0
libtpu: 0.0.40
codegen_flags: <defaults>
</compile_context>

<pallas_src>
import jax
import jax.numpy as jnp
from jax import lax
from jax.experimental import pallas as pl
from jax.experimental.pallas import tpu as pltpu

_EPS = 10e-4        # matches ConvONets normalize_* epsilon (1e-3)
_TQ_TILE = 256      # query-point tile (lane axis of the output); multiple of 128
_MAX_K_ELEMS = 8192  # target K-slab per grid-reduction step (bounds the (K, tT) weight temp)


# ----------------------------- in-kernel helpers -----------------------------

def _normalize_01(x, padding):
    """ConvONets normalize_coordinate / normalize_3d_coordinate (elementwise)."""
    x = x / (1.0 + padding + _EPS) + 0.5
    x = jnp.where(x >= 1.0, 1.0 - _EPS, x)
    x = jnp.where(x < 0.0, 0.0, x)
    return x


def _axis_hat(pix, n):
    """Per-axis bilinear tap weights as a hat function.

    pix: (1, tT) pixel-space coordinate in [0, n-1) (normalized coord is pre-clamped
    to [0, 1-eps], so the border clamp of grid_sample never triggers).
    Returns (n, tT) with w[i, t] = max(0, 1 - |i - pix[t]|) == the exact bilinear weights.
    """
    idx = lax.broadcasted_iota(jnp.int32, (n, pix.shape[1]), 0).astype(jnp.float32)
    return jnp.maximum(1.0 - jnp.abs(idx - pix), 0.0)


def _outer_flatten(a, b):
    """(A, tT) x (B, tT) -> (A*B, tT), flat row index = i*B + j (row-major).

    Lane axis (tT) is untouched; the reshape only merges major/sublane dims, so it is
    layout-trivial when B is a multiple of 8.
    """
    A, tT = a.shape
    Bn = b.shape[0]
    return (a[:, None, :] * b[None, :, :]).reshape(A * Bn, tT)


_COORD_SEL = {'xz': (0, 2), 'xy': (0, 1), 'yz': (1, 2)}  # (u -> W axis, v -> H axis)


# --------------------------------- kernels -----------------------------------

def _make_plane_concat_kernel(planes, H, W, C, padding):
    def kernel(p_ref, *refs):
        f_refs = refs[:-1]          # each (C, H*W) bf16
        o_ref = refs[-1]            # (n*C, tT) f32
        tT = p_ref.shape[1]
        # normalized coordinates (hoisted, shared by all planes), each (1, tT) lane-dense
        pn = [_normalize_01(p_ref[d:d + 1, :], padding) for d in range(3)]
        for i, name in enumerate(planes):
            ui, vi = _COORD_SEL[name]
            wx = _axis_hat(pn[ui] * float(W - 1), W)       # (W, tT)
            wy = _axis_hat(pn[vi] * float(H - 1), H)       # (H, tT)
            wgt = _outer_flatten(wy, wx)                   # (H*W, tT), flat = h*W + w
            o_ref[i * C:(i + 1) * C, :] = jnp.dot(
                f_refs[i][...], wgt.astype(jnp.bfloat16),
                preferred_element_type=jnp.float32)
    return kernel


def _make_plane_sum_kernel(planes, H, W, C, padding):
    def kernel(p_ref, f_ref, o_ref):
        # p_ref: (3, tT) f32 ; f_ref: (C, n*H*W) bf16 (planes concatenated along K)
        # o_ref: (C, tT) f32
        tT = p_ref.shape[1]
        pn = [_normalize_01(p_ref[d:d + 1, :], padding) for d in range(3)]
        wgts = []
        for name in planes:
            ui, vi = _COORD_SEL[name]
            wx = _axis_hat(pn[ui] * float(W - 1), W)
            wy = _axis_hat(pn[vi] * float(H - 1), H)
            wgts.append(_outer_flatten(wy, wx))
        wcat = wgts[0] if len(wgts) == 1 else jnp.concatenate(wgts, axis=0)  # (n*H*W, tT)
        # one fused matmul instead of n dots + (n-1) adds
        o_ref[...] = jnp.dot(f_ref[...], wcat.astype(jnp.bfloat16),
                             preferred_element_type=jnp.float32)
    return kernel


def _make_grid_kernel(D, H, W, C, dT, padding):
    def kernel(p_ref, f_ref, o_ref):
        # p_ref: (3, tT) f32 ; f_ref: (C, dT*H*W) bf16 (current D-tile) ; o_ref: (C, tT) f32
        tT = p_ref.shape[1]
        kk = pl.program_id(2)
        px = _normalize_01(p_ref[0:1, :], padding)   # -> W axis
        py = _normalize_01(p_ref[1:2, :], padding)   # -> H axis
        pz = _normalize_01(p_ref[2:3, :], padding)   # -> D axis
        wx = _axis_hat(px * float(W - 1), W)                         # (W, tT)
        wy = _axis_hat(py * float(H - 1), H)                         # (H, tT)
        zidx = (lax.broadcasted_iota(jnp.int32, (dT, tT), 0) + kk * dT).astype(jnp.float32)
        wz = jnp.maximum(1.0 - jnp.abs(zidx - pz * float(D - 1)), 0.0)  # (dT, tT)
        wgt = _outer_flatten(_outer_flatten(wz, wy), wx)             # (dT*H*W, tT)

        @pl.when(kk == 0)
        def _():
            o_ref[...] = jnp.zeros_like(o_ref)
        # output block index is constant over the D-reduction axis -> VMEM-resident accumulator
        o_ref[...] += jnp.dot(f_ref[...], wgt.astype(jnp.bfloat16),
                              preferred_element_type=jnp.float32)
    return kernel


# --------------------------------- wrapper -----------------------------------

def _choose_d_tile(D, HW, max_k_elems=_MAX_K_ELEMS):
    """D-tile so the (dT*HW, tT) weight temp stays small; block stays lane-legal."""
    if D * HW <= max_k_elems:
        return D
    for dT in range(D, 0, -1):
        if D % dT:
            continue
        k = dT * HW
        if k > max_k_elems:
            continue
        if k % 128:
            continue
        return dT
    return D


def _compiler_params(semantics):
    return pltpu.CompilerParams(dimension_semantics=semantics,
                                vmem_limit_bytes=64 * 1024 * 1024)


class FCDecoderPallas:
    """Pallas-TPU implementation of ConvONets FCDecoder.forward."""

    def __init__(self, dim=3, c_dim=128, out_dim=1, leaky=False,
                 sample_mode='bilinear', padding=0.1, concat_feat=True):
        assert sample_mode == 'bilinear'  # TODO(synk): 'nearest' sampling mode not implemented
        self.c_dim = c_dim
        self.sample_mode = sample_mode
        self.padding = padding
        self.concat_feat = concat_feat

    # p_t: (B, 3, T_pad) f32 ; feats: list of (B, C, H, W)
    def _decode_planes(self, p_t, feats, planes, concat):
        B, _, T_pad = p_t.shape
        _, C, H, W = feats[0].shape
        n = len(planes)
        tT = min(T_pad, _TQ_TILE)
        nT = T_pad // tT

        p_spec = pl.BlockSpec((None, 3, tT), lambda b, t: (b, 0, t))
        if concat:
            f_in = [f.reshape(B, C, H * W).astype(jnp.bfloat16) for f in feats]
            kernel = _make_plane_concat_kernel(tuple(planes), H, W, C, self.padding)
            in_specs = [p_spec] + [pl.BlockSpec((None, C, H * W), lambda b, t: (b, 0, 0))] * n
            out_c = n * C
            args = (p_t, *f_in)
        else:
            # concatenate planes along K so the kernel issues one fused matmul
            f_cat = jnp.concatenate([f.reshape(B, C, H * W) for f in feats],
                                    axis=-1).astype(jnp.bfloat16)
            kernel = _make_plane_sum_kernel(tuple(planes), H, W, C, self.padding)
            in_specs = [p_spec,
                        pl.BlockSpec((None, C, n * H * W), lambda b, t: (b, 0, 0))]
            out_c = C
            args = (p_t, f_cat)

        return pl.pallas_call(
            kernel,
            out_shape=jax.ShapeDtypeStruct((B, out_c, T_pad), jnp.float32),
            grid=(B, nT),
            in_specs=in_specs,
            out_specs=pl.BlockSpec((None, out_c, tT), lambda b, t: (b, 0, t)),
            compiler_params=_compiler_params(("parallel", "parallel")),
        )(*args)                                        # (B, out_c, T_pad), T lane-dense

    # p_t: (B, 3, T_pad) f32 ; c_grid: (B, C, D, H, W)
    def _decode_grid(self, p_t, c_grid):
        B, _, T_pad = p_t.shape
        _, C, D, H, W = c_grid.shape
        tT = min(T_pad, _TQ_TILE)
        nT = T_pad // tT
        dT = _choose_d_tile(D, H * W)
        nK = D // dT
        f = c_grid.reshape(B, C, D * H * W).astype(jnp.bfloat16)   # pure reshape, no transpose
        kernel = _make_grid_kernel(D, H, W, C, dT, self.padding)
        return pl.pallas_call(
            kernel,
            out_shape=jax.ShapeDtypeStruct((B, C, T_pad), jnp.float32),
            grid=(B, nT, nK),
            in_specs=[pl.BlockSpec((None, 3, tT), lambda b, t, k: (b, 0, t)),
                      pl.BlockSpec((None, C, dT * H * W), lambda b, t, k: (b, 0, k))],
            out_specs=pl.BlockSpec((None, C, tT), lambda b, t, k: (b, 0, t)),
            compiler_params=_compiler_params(("parallel", "parallel", "arbitrary")),
        )(p_t, f)                                       # (B, C, T_pad)

    def __call__(self, p, c_plane):
        if self.c_dim == 0:
            return None
        keys = list(c_plane.keys())
        planes = [k for k in ('xz', 'xy', 'yz') if k in keys]
        p = p.astype(jnp.float32)
        B, T, _ = p.shape

        # lane-dense coordinates, padded T to a multiple of the query tile
        p_t = jnp.transpose(p, (0, 2, 1))               # (B, 3, T)
        T_pad = T
        if T > _TQ_TILE:
            T_pad = -(-T // _TQ_TILE) * _TQ_TILE
            if T_pad != T:
                p_t = jnp.pad(p_t, ((0, 0), (0, 0), (0, T_pad - T)))

        if self.concat_feat:
            # The original torch code only works with plane features in this branch
            # (it would call .append on a tensor if 'grid' were also present).
            assert planes and 'grid' not in keys
            out = self._decode_planes(p_t, [c_plane[k] for k in planes], planes, concat=True)
        else:
            out = None
            if 'grid' in keys:
                out = self._decode_grid(p_t, c_plane['grid'])
            if planes:
                po = self._decode_planes(p_t, [c_plane[k] for k in planes], planes, concat=False)
                out = po if out is None else out + po

        out = out[:, :, :T]                             # drop query padding
        return jnp.transpose(out, (0, 2, 1))            # (B, T, out_c), matches PyTorch


# ----------------------- pure-JAX reference (for checking) -------------------

def _ref_norm(x, padding):
    x = x / (1.0 + padding + _EPS) + 0.5
    x = jnp.where(x >= 1.0, 1.0 - _EPS, x)
    return jnp.where(x < 0.0, 0.0, x)


def _ref_sample_plane(p, c, plane, padding):
    B, C, H, W = c.shape
    sel = {'xz': (0, 2), 'xy': (0, 1), 'yz': (1, 2)}[plane]
    xy = _ref_norm(p[..., sel], padding)
    u, v = xy[..., 0], xy[..., 1]
    ix, iy = u * (W - 1), v * (H - 1)
    x0 = jnp.floor(ix).astype(jnp.int32); x1 = jnp.minimum(x0 + 1, W - 1)
    y0 = jnp.floor(iy).astype(jnp.int32); y1 = jnp.minimum(y0 + 1, H - 1)
    fx = (ix - x0)[:, None, :]; fy = (iy - y0)[:, None, :]
    g = jax.vmap(lambda cb, yb, xb: cb[:, yb, xb])
    return (g(c, y0, x0) * (1 - fy) * (1 - fx) + g(c, y0, x1) * (1 - fy) * fx +
            g(c, y1, x0) * fy * (1 - fx) + g(c, y1, x1) * fy * fx)  # (B, C, T)


def _ref_sample_grid(p, c, padding):
    B, C, D, H, W = c.shape
    pn = _ref_norm(p, padding)
    u, v, w = pn[..., 0], pn[..., 1], pn[..., 2]
    ix, iy, iz = u * (W - 1), v * (H - 1), w * (D - 1)
    x0 = jnp.floor(ix).astype(jnp.int32); x1 = jnp.minimum(x0 + 1, W - 1)
    y0 = jnp.floor(iy).astype(jnp.int32); y1 = jnp.minimum(y0 + 1, H - 1)
    z0 = jnp.floor(iz).astype(jnp.int32); z1 = jnp.minimum(z0 + 1, D - 1)
    fx = (ix - x0)[:, None, :]; fy = (iy - y0)[:, None, :]; fz = (iz - z0)[:, None, :]
    g = jax.vmap(lambda cb, zb, yb, xb: cb[:, zb, yb, xb])
    out = 0.0
    for zi, wz in ((z0, 1 - fz), (z1, fz)):
        for yi, wy in ((y0, 1 - fy), (y1, fy)):
            for xi, wx in ((x0, 1 - fx), (x1, fx)):
                out = out + g(c, zi, yi, xi) * wz * wy * wx
    return out  # (B, C, T)


def _ref_forward(p, c_plane, padding, concat_feat):
    keys = list(c_plane.keys())
    planes = [k for k in ('xz', 'xy', 'yz') if k in keys]
    if concat_feat:
        c = jnp.concatenate([_ref_sample_plane(p, c_plane[k], k, padding) for k in planes], axis=1)
    else:
        c = 0.0
        if 'grid' in keys:
            c = c + _ref_sample_grid(p, c_plane['grid'], padding)
        for k in planes:
            c = c + _ref_sample_plane(p, c_plane[k], k, padding)
    return jnp.transpose(c, (0, 2, 1))


# ----------------------------------- main -------------------------------------

if __name__ == "__main__":
    key = jax.random.PRNGKey(0)
    B, T, C = 2, 64, 32
    R = 8   # plane resolution (H = W = R)
    G = 8   # grid resolution (D = H = W = G)

    k1, k2, k3, k4, k5 = jax.random.split(key, 5)
    p = jax.random.uniform(k1, (B, T, 3), minval=-0.55, maxval=0.55, dtype=jnp.float32)
    c_xz = jax.random.normal(k2, (B, C, R, R), dtype=jnp.float32)
    c_xy = jax.random.normal(k3, (B, C, R, R), dtype=jnp.float32)
    c_yz = jax.random.normal(k4, (B, C, R, R), dtype=jnp.float32)
    c_grid = jax.random.normal(k5, (B, C, G, G, G), dtype=jnp.float32)

    # The kernel intentionally quantizes features + interpolation weights to bf16 for the MXU
    # (f32 accumulation); validate against a reference fed the same bf16-rounded features.
    def _q(x):
        return x.astype(jnp.bfloat16).astype(jnp.float32)

    # concat_feat=True with the three planes -> (B, T, 3*C)
    dec_concat = FCDecoderPallas(c_dim=C, concat_feat=True)
    planes_in = {'xz': c_xz, 'xy': c_xy, 'yz': c_yz}
    out_planes = jax.block_until_ready(dec_concat(p, planes_in))
    assert out_planes.shape == (B, T, 3 * C)
    ref_planes = _ref_forward(p, {k: _q(v) for k, v in planes_in.items()}, 0.1, True)
    assert jnp.allclose(out_planes, ref_planes, atol=5e-2, rtol=5e-2)

    # concat_feat=False (sum path) with grid + all three planes -> (B, T, C)
    dec_sum = FCDecoderPallas(c_dim=C, concat_feat=False)
    sum_in = {'grid': c_grid, 'xz': c_xz, 'xy': c_xy, 'yz': c_yz}
    out_sum = jax.block_until_ready(dec_sum(p, sum_in))
    assert out_sum.shape == (B, T, C)
    ref_sum = _ref_forward(p, {k: _q(v) for k, v in sum_in.items()}, 0.1, False)
    assert jnp.allclose(out_sum, ref_sum, atol=5e-2, rtol=5e-2)

    print("KERNEL_OK")
</pallas_src>

<mosaic_0001>
module attributes {stable_mosaic.version = 11 : i64} {
  func.func @kernel(%arg0: i32, %arg1: i32, %arg2: memref<1x3x64xf32, #tpu.memory_space<vmem>>, %arg3: memref<1x32x64xbf16, #tpu.memory_space<vmem>>, %arg4: memref<1x32x64xbf16, #tpu.memory_space<vmem>>, %arg5: memref<1x32x64xbf16, #tpu.memory_space<vmem>>, %arg6: memref<1x96x64xf32, #tpu.memory_space<vmem>>) attributes {dimension_semantics = [#tpu.dimension_semantics<parallel>, #tpu.dimension_semantics<parallel>], iteration_bounds = array<i64: 2, 1>, scalar_prefetch = 0 : i64, scratch_operands = 0 : i64, tpu.core_type = #tpu.core_type<tc>, window_params = [{transform_indices = @transform_0, window_bounds = array<i64: 1, 3, 64>}, {transform_indices = @transform_1, window_bounds = array<i64: 1, 32, 64>}, {transform_indices = @transform_2, window_bounds = array<i64: 1, 32, 64>}, {transform_indices = @transform_3, window_bounds = array<i64: 1, 32, 64>}, {transform_indices = @transform_4, window_bounds = array<i64: 1, 96, 64>}]} {
    %c0 = arith.constant 0 : index
    %c0_0 = arith.constant 0 : index
    %c0_1 = arith.constant 0 : index
    %0 = vector.load %arg2[%c0, %c0_0, %c0_1] : memref<1x3x64xf32, #tpu.memory_space<vmem>>, vector<1x1x64xf32>
    %1 = vector.shape_cast %0 : vector<1x1x64xf32> to vector<1x64xf32>
    %cst = arith.constant 1.101000e+00 : f32
    %2 = vector.broadcast %cst : f32 to vector<1x64xf32>
    %3 = arith.divf %1, %2 : vector<1x64xf32>
    %cst_2 = arith.constant 5.000000e-01 : f32
    %4 = vector.broadcast %cst_2 : f32 to vector<1x64xf32>
    %5 = arith.addf %3, %4 : vector<1x64xf32>
    %cst_3 = arith.constant 1.000000e+00 : f32
    %6 = vector.broadcast %cst_3 : f32 to vector<1x64xf32>
    %7 = arith.cmpf oge, %5, %6 : vector<1x64xf32>
    %cst_4 = arith.constant 9.990000e-01 : f32
    %8 = vector.broadcast %cst_4 : f32 to vector<1x64xf32>
    %9 = arith.select %7, %8, %5 : vector<1x64xi1>, vector<1x64xf32>
    %cst_5 = arith.constant 0.000000e+00 : f32
    %10 = vector.broadcast %cst_5 : f32 to vector<1x64xf32>
    %11 = arith.cmpf olt, %9, %10 : vector<1x64xf32>
    %cst_6 = arith.constant 0.000000e+00 : f32
    %12 = vector.broadcast %cst_6 : f32 to vector<1x64xf32>
    %13 = arith.select %11, %12, %9 : vector<1x64xi1>, vector<1x64xf32>
    %c0_7 = arith.constant 0 : index
    %c1 = arith.constant 1 : index
    %c0_8 = arith.constant 0 : index
    %14 = vector.load %arg2[%c0_7, %c1, %c0_8] : memref<1x3x64xf32, #tpu.memory_space<vmem>>, vector<1x1x64xf32>
    %15 = vector.shape_cast %14 : vector<1x1x64xf32> to vector<1x64xf32>
    %cst_9 = arith.constant 1.101000e+00 : f32
    %16 = vector.broadcast %cst_9 : f32 to vector<1x64xf32>
    %17 = arith.divf %15, %16 : vector<1x64xf32>
    %cst_10 = arith.constant 5.000000e-01 : f32
    %18 = vector.broadcast %cst_10 : f32 to vector<1x64xf32>
    %19 = arith.addf %17, %18 : vector<1x64xf32>
    %cst_11 = arith.constant 1.000000e+00 : f32
    %20 = vector.broadcast %cst_11 : f32 to vector<1x64xf32>
    %21 = arith.cmpf oge, %19, %20 : vector<1x64xf32>
    %cst_12 = arith.constant 9.990000e-01 : f32
    %22 = vector.broadcast %cst_12 : f32 to vector<1x64xf32>
    %23 = arith.select %21, %22, %19 : vector<1x64xi1>, vector<1x64xf32>
    %cst_13 = arith.constant 0.000000e+00 : f32
    %24 = vector.broadcast %cst_13 : f32 to vector<1x64xf32>
    %25 = arith.cmpf olt, %23, %24 : vector<1x64xf32>
    %cst_14 = arith.constant 0.000000e+00 : f32
    %26 = vector.broadcast %cst_14 : f32 to vector<1x64xf32>
    %27 = arith.select %25, %26, %23 : vector<1x64xi1>, vector<1x64xf32>
    %c0_15 = arith.constant 0 : index
    %c2 = arith.constant 2 : index
    %c0_16 = arith.constant 0 : index
    %28 = vector.load %arg2[%c0_15, %c2, %c0_16] : memref<1x3x64xf32, #tpu.memory_space<vmem>>, vector<1x1x64xf32>
    %29 = vector.shape_cast %28 : vector<1x1x64xf32> to vector<1x64xf32>
    %cst_17 = arith.constant 1.101000e+00 : f32
    %30 = vector.broadcast %cst_17 : f32 to vector<1x64xf32>
    %31 = arith.divf %29, %30 : vector<1x64xf32>
    %cst_18 = arith.constant 5.000000e-01 : f32
    %32 = vector.broadcast %cst_18 : f32 to vector<1x64xf32>
    %33 = arith.addf %31, %32 : vector<1x64xf32>
    %cst_19 = arith.constant 1.000000e+00 : f32
    %34 = vector.broadcast %cst_19 : f32 to vector<1x64xf32>
    %35 = arith.cmpf oge, %33, %34 : vector<1x64xf32>
    %cst_20 = arith.constant 9.990000e-01 : f32
    %36 = vector.broadcast %cst_20 : f32 to vector<1x64xf32>
    %37 = arith.select %35, %36, %33 : vector<1x64xi1>, vector<1x64xf32>
    %cst_21 = arith.constant 0.000000e+00 : f32
    %38 = vector.broadcast %cst_21 : f32 to vector<1x64xf32>
    %39 = arith.cmpf olt, %37, %38 : vector<1x64xf32>
    %cst_22 = arith.constant 0.000000e+00 : f32
    %40 = vector.broadcast %cst_22 : f32 to vector<1x64xf32>
    %41 = arith.select %39, %40, %37 : vector<1x64xi1>, vector<1x64xf32>
    %cst_23 = arith.constant 7.000000e+00 : f32
    %42 = vector.broadcast %cst_23 : f32 to vector<1x64xf32>
    %43 = arith.mulf %13, %42 : vector<1x64xf32>
    %44 = tpu.iota {dimensions = array<i32: 0>} : vector<8x64xi32>
    %45 = arith.sitofp %44 : vector<8x64xi32> to vector<8x64xf32>
    %46 = vector.broadcast %43 : vector<1x64xf32> to vector<8x64xf32>
    %47 = arith.subf %45, %46 : vector<8x64xf32>
    %48 = math.absf %47 : vector<8x64xf32>
    %cst_24 = arith.constant 1.000000e+00 : f32
    %49 = vector.broadcast %cst_24 : f32 to vector<8x64xf32>
    %50 = arith.subf %49, %48 : vector<8x64xf32>
    %cst_25 = arith.constant 0.000000e+00 : f32
    %51 = vector.broadcast %cst_25 : f32 to vector<8x64xf32>
    %52 = arith.maximumf %50, %51 : vector<8x64xf32>
    %cst_26 = arith.constant 7.000000e+00 : f32
    %53 = vector.broadcast %cst_26 : f32 to vector<1x64xf32>
    %54 = arith.mulf %41, %53 : vector<1x64xf32>
    %55 = tpu.iota {dimensions = array<i32: 0>} : vector<8x64xi32>
    %56 = arith.sitofp %55 : vector<8x64xi32> to vector<8x64xf32>
    %57 = vector.broadcast %54 : vector<1x64xf32> to vector<8x64xf32>
    %58 = arith.subf %56, %57 : vector<8x64xf32>
    %59 = math.absf %58 : vector<8x64xf32>
    %cst_27 = arith.constant 1.000000e+00 : f32
    %60 = vector.broadcast %cst_27 : f32 to vector<8x64xf32>
    %61 = arith.subf %60, %59 : vector<8x64xf32>
    %cst_28 = arith.constant 0.000000e+00 : f32
    %62 = vector.broadcast %cst_28 : f32 to vector<8x64xf32>
    %63 = arith.maximumf %61, %62 : vector<8x64xf32>
    %64 = vector.shape_cast %63 : vector<8x64xf32> to vector<8x1x64xf32>
    %65 = vector.shape_cast %52 : vector<8x64xf32> to vector<1x8x64xf32>
    %66 = vector.broadcast %64 : vector<8x1x64xf32> to vector<8x8x64xf32>
    %67 = vector.broadcast %65 : vector<1x8x64xf32> to vector<8x8x64xf32>
    %68 = arith.mulf %66, %67 : vector<8x8x64xf32>
    %69 = vector.shape_cast %68 : vector<8x8x64xf32> to vector<64x64xf32>
    %c0_29 = arith.constant 0 : index
    %c0_30 = arith.constant 0 : index
    %c0_31 = arith.constant 0 : index
    %70 = vector.load %arg3[%c0_29, %c0_30, %c0_31] : memref<1x32x64xbf16, #tpu.memory_space<vmem>>, vector<1x32x64xbf16>
    %71 = vector.shape_cast %70 : vector<1x32x64xbf16> to vector<32x64xbf16>
    %72 = arith.truncf %69 : vector<64x64xf32> to vector<64x64xbf16>
    %cst_32 = arith.constant dense<0.000000e+00> : vector<32x64xf32>
    %73 = tpu.matmul %71, %72, %cst_32 {dimension_numbers = #tpu.dot_dimension_numbers<[1], [0], [0], [1], [0, 0, 1, 1], [], []>} : vector<32x64xbf16>, vector<64x64xbf16>, vector<32x64xf32> -> vector<32x64xf32>
    %c0_33 = arith.constant 0 : index
    %c0_34 = arith.constant 0 : index
    %c0_35 = arith.constant 0 : index
    %74 = vector.load %arg6[%c0_33, %c0_34, %c0_35] : memref<1x96x64xf32, #tpu.memory_space<vmem>>, vector<1x32x64xf32>
    %75 = vector.shape_cast %74 : vector<1x32x64xf32> to vector<32x64xf32>
    %76 = vector.shape_cast %73 : vector<32x64xf32> to vector<1x32x64xf32>
    tpu.vector_store %arg6[%c0_33, %c0_34, %c0_35], %76 {strides = array<i32>} : memref<1x96x64xf32, #tpu.memory_space<vmem>>, vector<1x32x64xf32>,
    %cst_36 = arith.constant 7.000000e+00 : f32
    %77 = vector.broadcast %cst_36 : f32 to vector<1x64xf32>
    %78 = arith.mulf %13, %77 : vector<1x64xf32>
    %79 = tpu.iota {dimensions = array<i32: 0>} : vector<8x64xi32>
    %80 = arith.sitofp %79 : vector<8x64xi32> to vector<8x64xf32>
    %81 = vector.broadcast %78 : vector<1x64xf32> to vector<8x64xf32>
    %82 = arith.subf %80, %81 : vector<8x64xf32>
    %83 = math.absf %82 : vector<8x64xf32>
    %cst_37 = arith.constant 1.000000e+00 : f32
    %84 = vector.broadcast %cst_37 : f32 to vector<8x64xf32>
    %85 = arith.subf %84, %83 : vector<8x64xf32>
    %cst_38 = arith.constant 0.000000e+00 : f32
    %86 = vector.broadcast %cst_38 : f32 to vector<8x64xf32>
    %87 = arith.maximumf %85, %86 : vector<8x64xf32>
    %cst_39 = arith.constant 7.000000e+00 : f32
    %88 = vector.broadcast %cst_39 : f32 to vector<1x64xf32>
    %89 = arith.mulf %27, %88 : vector<1x64xf32>
    %90 = tpu.iota {dimensions = array<i32: 0>} : vector<8x64xi32>
    %91 = arith.sitofp %90 : vector<8x64xi32> to vector<8x64xf32>
    %92 = vector.broadcast %89 : vector<1x64xf32> to vector<8x64xf32>
    %93 = arith.subf %91, %92 : vector<8x64xf32>
    %94 = math.absf %93 : vector<8x64xf32>
    %cst_40 = arith.constant 1.000000e+00 : f32
    %95 = vector.broadcast %cst_40 : f32 to vector<8x64xf32>
    %96 = arith.subf %95, %94 : vector<8x64xf32>
    %cst_41 = arith.constant 0.000000e+00 : f32
    %97 = vector.broadcast %cst_41 : f32 to vector<8x64xf32>
    %98 = arith.maximumf %96, %97 : vector<8x64xf32>
    %99 = vector.shape_cast %98 : vector<8x64xf32> to vector<8x1x64xf32>
    %100 = vector.shape_cast %87 : vector<8x64xf32> to vector<1x8x64xf32>
    %101 = vector.broadcast %99 : vector<8x1x64xf32> to vector<8x8x64xf32>
    %102 = vector.broadcast %100 : vector<1x8x64xf32> to vector<8x8x64xf32>
    %103 = arith.mulf %101, %102 : vector<8x8x64xf32>
    %104 = vector.shape_cast %103 : vector<8x8x64xf32> to vector<64x64xf32>
    %c0_42 = arith.constant 0 : index
    %c0_43 = arith.constant 0 : index
    %c0_44 = arith.constant 0 : index
    %105 = vector.load %arg4[%c0_42, %c0_43, %c0_44] : memref<1x32x64xbf16, #tpu.memory_space<vmem>>, vector<1x32x64xbf16>
    %106 = vector.shape_cast %105 : vector<1x32x64xbf16> to vector<32x64xbf16>
    %107 = arith.truncf %104 : vector<64x64xf32> to vector<64x64xbf16>
    %cst_45 = arith.constant dense<0.000000e+00> : vector<32x64xf32>
    %108 = tpu.matmul %106, %107, %cst_45 {dimension_numbers = #tpu.dot_dimension_numbers<[1], [0], [0], [1], [0, 0, 1, 1], [], []>} : vector<32x64xbf16>, vector<64x64xbf16>, vector<32x64xf32> -> vector<32x64xf32>
    %c0_46 = arith.constant 0 : index
    %c32 = arith.constant 32 : index
    %c0_47 = arith.constant 0 : index
    %109 = vector.load %arg6[%c0_46, %c32, %c0_47] : memref<1x96x64xf32, #tpu.memory_space<vmem>>, vector<1x32x64xf32>
    %110 = vector.shape_cast %109 : vector<1x32x64xf32> to vector<32x64xf32>
    %111 = vector.shape_cast %108 : vector<32x64xf32> to vector<1x32x64xf32>
    tpu.vector_store %arg6[%c0_46, %c32, %c0_47], %111 {strides = array<i32>} : memref<1x96x64xf32, #tpu.memory_space<vmem>>, vector<1x32x64xf32>,
    %cst_48 = arith.constant 7.000000e+00 : f32
    %112 = vector.broadcast %cst_48 : f32 to vector<1x64xf32>
    %113 = arith.mulf %27, %112 : vector<1x64xf32>
    %114 = tpu.iota {dimensions = array<i32: 0>} : vector<8x64xi32>
    %115 = arith.sitofp %114 : vector<8x64xi32> to vector<8x64xf32>
    %116 = vector.broadcast %113 : vector<1x64xf32> to vector<8x64xf32>
    %117 = arith.subf %115, %116 : vector<8x64xf32>
    %118 = math.absf %117 : vector<8x64xf32>
    %cst_49 = arith.constant 1.000000e+00 : f32
    %119 = vector.broadcast %cst_49 : f32 to vector<8x64xf32>
    %120 = arith.subf %119, %118 : vector<8x64xf32>
    %cst_50 = arith.constant 0.000000e+00 : f32
    %121 = vector.broadcast %cst_50 : f32 to vector<8x64xf32>
    %122 = arith.maximumf %120, %121 : vector<8x64xf32>
    %cst_51 = arith.constant 7.000000e+00 : f32
    %123 = vector.broadcast %cst_51 : f32 to vector<1x64xf32>
    %124 = arith.mulf %41, %123 : vector<1x64xf32>
    %125 = tpu.iota {dimensions = array<i32: 0>} : vector<8x64xi32>
    %126 = arith.sitofp %125 : vector<8x64xi32> to vector<8x64xf32>
    %127 = vector.broadcast %124 : vector<1x64xf32> to vector<8x64xf32>
    %128 = arith.subf %126, %127 : vector<8x64xf32>
    %129 = math.absf %128 : vector<8x64xf32>
    %cst_52 = arith.constant 1.000000e+00 : f32
    %130 = vector.broadcast %cst_52 : f32 to vector<8x64xf32>
    %131 = arith.subf %130, %129 : vector<8x64xf32>
    %cst_53 = arith.constant 0.000000e+00 : f32
    %132 = vector.broadcast %cst_53 : f32 to vector<8x64xf32>
    %133 = arith.maximumf %131, %132 : vector<8x64xf32>
    %134 = vector.shape_cast %133 : vector<8x64xf32> to vector<8x1x64xf32>
    %135 = vector.shape_cast %122 : vector<8x64xf32> to vector<1x8x64xf32>
    %136 = vector.broadcast %134 : vector<8x1x64xf32> to vector<8x8x64xf32>
    %137 = vector.broadcast %135 : vector<1x8x64xf32> to vector<8x8x64xf32>
    %138 = arith.mulf %136, %137 : vector<8x8x64xf32>
    %139 = vector.shape_cast %138 : vector<8x8x64xf32> to vector<64x64xf32>
    %c0_54 = arith.constant 0 : index
    %c0_55 = arith.constant 0 : index
    %c0_56 = arith.constant 0 : index
    %140 = vector.load %arg5[%c0_54, %c0_55, %c0_56] : memref<1x32x64xbf16, #tpu.memory_space<vmem>>, vector<1x32x64xbf16>
    %141 = vector.shape_cast %140 : vector<1x32x64xbf16> to vector<32x64xbf16>
    %142 = arith.truncf %139 : vector<64x64xf32> to vector<64x64xbf16>
    %cst_57 = arith.constant dense<0.000000e+00> : vector<32x64xf32>
    %143 = tpu.matmul %141, %142, %cst_57 {dimension_numbers = #tpu.dot_dimension_numbers<[1], [0], [0], [1], [0, 0, 1, 1], [], []>} : vector<32x64xbf16>, vector<64x64xbf16>, vector<32x64xf32> -> vector<32x64xf32>
    %c0_58 = arith.constant 0 : index
    %c64 = arith.constant 64 : index
    %c0_59 = arith.constant 0 : index
    %144 = vector.load %arg6[%c0_58, %c64, %c0_59] : memref<1x96x64xf32, #tpu.memory_space<vmem>>, vector<1x32x64xf32>
    %145 = vector.shape_cast %144 : vector<1x32x64xf32> to vector<32x64xf32>
    %146 = vector.shape_cast %143 : vector<32x64xf32> to vector<1x32x64xf32>
    tpu.vector_store %arg6[%c0_58, %c64, %c0_59], %146 {strides = array<i32>} : memref<1x96x64xf32, #tpu.memory_space<vmem>>, vector<1x32x64xf32>,
    return
  }
  func.func @transform_0(%arg0: i32, %arg1: i32) -> (i32, i32, i32) {
    %c0_i32 = arith.constant 0 : i32
    %c0_i32_0 = arith.constant 0 : i32
    return %arg0, %c0_i32, %arg1 : i32, i32, i32
  }
  func.func @transform_1(%arg0: i32, %arg1: i32) -> (i32, i32, i32) {
    %c0_i32 = arith.constant 0 : i32
    %c0_i32_0 = arith.constant 0 : i32
    %c0_i32_1 = arith.constant 0 : i32
    return %arg0, %c0_i32, %c0_i32_0 : i32, i32, i32
  }
  func.func @transform_2(%arg0: i32, %arg1: i32) -> (i32, i32, i32) {
    %c0_i32 = arith.constant 0 : i32
    %c0_i32_0 = arith.constant 0 : i32
    %c0_i32_1 = arith.constant 0 : i32
    return %arg0, %c0_i32, %c0_i32_0 : i32, i32, i32
  }
  func.func @transform_3(%arg0: i32, %arg1: i32) -> (i32, i32, i32) {
    %c0_i32 = arith.constant 0 : i32
    %c0_i32_0 = arith.constant 0 : i32
    %c0_i32_1 = arith.constant 0 : i32
    return %arg0, %c0_i32, %c0_i32_0 : i32, i32, i32
  }
  func.func @transform_4(%arg0: i32, %arg1: i32) -> (i32, i32, i32) {
    %c0_i32 = arith.constant 0 : i32
    %c0_i32_0 = arith.constant 0 : i32
    return %arg0, %c0_i32, %arg1 : i32, i32, i32
  }
}

</mosaic_0001>

<llo_original>
// kernel: tpu_custom_call.1
$region0: #{tpu_custom_call.1}
  #allocation0 [shape = 'u32[]', space=smem, size = 0x4, offset = 0x4, fixed_abs, tag = 'smem constant byte address 0x4 - core index']
  #allocation1 [shape = 'u32[144,128]{1,0:T(1,128)}', space=vmem, size = 0x12000, scoped, tag = 'internal scratch']
  %s0 = inlined_call_operand.hbm [shape: f32[2,3,64], index: 0, kind: input, shape index: {}]
  %s1 = inlined_call_operand.hbm [shape: bf16[2,32,64], index: 1, kind: input, shape index: {}]
  %s2 = inlined_call_operand.hbm [shape: bf16[2,32,64], index: 2, kind: input, shape index: {}]
  %s3 = inlined_call_operand.hbm [shape: bf16[2,32,64], index: 3, kind: input, shape index: {}]
  %s4 = inlined_call_operand.hbm [shape: f32[2,96,64], index: 4, kind: output, shape index: {}]
  %s5 = sld [smem:[#allocation0]]
  $region65: #{tpu_custom_call.1} parent=0
    _
  %s7 = ssub.s32 1, %s5
  %s8 = scalar_select 0, %s7, %s5
  $region1: #{tpu_custom_call.1} parent=0
    #allocation2 [shape = 'u8[4096]{0}', space=vmem, size = 0x1000, scoped, tag = 'input window, operand 0']
    #allocation3 [shape = 's32[2]{0}', space=sflag, size = 0x8, scoped, tag = 'scoped memory for tpu_custom_call.1']
    #allocation4 [shape = 's32[2]{0}', space=sflag, size = 0x8, scoped, tag = 'scoped memory for tpu_custom_call.1']
    #allocation5 [shape = 'u8[16384]{0}', space=vmem, size = 0x4000, scoped, tag = 'input window, operand 1']
    #allocation6 [shape = 's32[2]{0}', space=sflag, size = 0x8, scoped, tag = 'scoped memory for tpu_custom_call.1']
    #allocation7 [shape = 'u8[16384]{0}', space=vmem, size = 0x4000, scoped, tag = 'input window, operand 2']
    #allocation8 [shape = 'u8[16384]{0}', space=vmem, size = 0x4000, scoped, tag = 'input window, operand 3']
    #allocation9 [shape = 's32[2]{0}', space=sflag, size = 0x8, scoped, tag = 'scoped memory for tpu_custom_call.1']
    #allocation10 [shape = 'u8[98304]{0}', space=vmem, size = 0x18000, scoped, tag = 'output window, operand 0']
    %9 = vsyncpa [#allocation3], 0
    %s10 = scalar_lea.sflag [#allocation3], 1
    %11 = vsyncpa %s10, 0
    %12 = vsyncpa [#allocation6], 0
    %s13 = scalar_lea.sflag [#allocation6], 1
    %14 = vsyncpa %s13, 0
    %15 = vsyncpa [#allocation9], 0
    %s16 = scalar_lea.sflag [#allocation9], 1
    %17 = vsyncpa %s16, 0
    %18 = vsyncpa [#allocation4], 0
    %s19 = scalar_lea.sflag [#allocation4], 1
    %20 = vsyncpa %s19, 0
    loop: start=0, step=1, limit=4
    $region2: #{tpu_custom_call.1} parent=1 // loop_pre_header
      _
    $region3: #{tpu_custom_call.1} parent=1 // loop_header
      %s22 = sphi 0, %s26
      %p23 = scmp.ge.s32.totalorder %s22, 4
      %s29 = sphi 0, %s41
      %s30 = sphi 0, %s37
      %s31 = sphi 0, %s29
      %s32 = sphi 0, %s30
      %s33 = sphi 0, %s31
      %s34 = sphi 0, %s32
      %s46 = sphi 0, %s48
      %s49 = sphi 0, %s46
      %s50 = sphi 0, %s49
      %s66 = sphi 0, %s50
      %s72 = sphi 0, %s74
      %s75 = sphi 0, %s72
      %s76 = sphi 0, %s75
      %s92 = sphi 0, %s76
      %s98 = sphi 0, %s100
      %s101 = sphi 0, %s98
      %s102 = sphi 0, %s101
      %s118 = sphi 0, %s102
      %s124 = sphi 0, %s126
      %s127 = sphi 0, %s124
      %s128 = sphi 0, %s127
      %s144 = sphi 0, %s128
      %s152 = sphi 0, %s154
      %s155 = sphi 0, %s152
      %s156 = sphi 0, %s155
      %s172 = sphi 0, %s156
    $region4: #{tpu_custom_call.1} parent=1 // loop_header_branch
      %25 = sbr.rel (%p23) target = $region8
    $region5: #{tpu_custom_call.1} parent=1 // loop_body
      %s27 = ssub.s32 %s22, 1
      %s28 = ssub.s32 %s22, 2
      %s35 = sadd.s32 1, %s30
      %p36 = scmp.ge.s32.totalorder %s35, 1
      %s37 = scalar_select %p36, 0, %s35
      %s38 = sadd.s32 1, %s29
      %s39 = scalar_select %p36, %s38, %s29
      %p40 = scmp.ge.s32.totalorder %s39, 2
      %s41 = scalar_select %p40, 0, %s39
      %s42 = ssub.s32 %s29, %s41
      %s43 = ssub.s32 %s30, %s37
      %s44 = sor.u32 %s42, %s43
      %p45 = scmp.eq.s32.totalorder %s44, 0
      %s47 = sadd.s32 %s46, 1
      %s48 = scalar_select %p45, %s46, %s47
      %p51 = pneg %p45
      %p52 = scmp.eq.s32.totalorder %s22, 1
      %p53 = por %p51, %p52
      %p54 = scmp.ne.s32.totalorder %s46, %s49
      %p55 = scmp.eq.s32.totalorder %s22, 0
      %p56 = por %p54, %p55
      %p57 = scmp.ne.s32.totalorder %s46, %s49
      %p58 = scmp.eq.s32.totalorder %s27, 1
      %p59 = por %p57, %p58
      %p60 = scmp.ne.s32.totalorder %s49, %s50
      %p61 = scmp.eq.s32.totalorder %s27, 0
      %p62 = por %p60, %p61
      %p63 = scmp.ne.s32.totalorder %s49, %s50
      %p64 = scmp.eq.s32.totalorder %s28, 1
      %p65 = por %p63, %p64
      %p67 = scmp.ne.s32.totalorder %s50, %s66
      %p68 = scmp.eq.s32.totalorder %s28, 0
      %p69 = por %p67, %p68
      %s70 = ssub.s32 %s29, %s41
      %p71 = scmp.eq.s32.totalorder %s70, 0
      %s73 = sadd.s32 %s72, 1
      %s74 = scalar_select %p71, %s72, %s73
      %p77 = pneg %p71
      %p78 = scmp.eq.s32.totalorder %s22, 1
      %p79 = por %p77, %p78
      %p80 = scmp.ne.s32.totalorder %s72, %s75
      %p81 = scmp.eq.s32.totalorder %s22, 0
      %p82 = por %p80, %p81
      %p83 = scmp.ne.s32.totalorder %s72, %s75
      %p84 = scmp.eq.s32.totalorder %s27, 1
      %p85 = por %p83, %p84
      %p86 = scmp.ne.s32.totalorder %s75, %s76
      %p87 = scmp.eq.s32.totalorder %s27, 0
      %p88 = por %p86, %p87
      %p89 = scmp.ne.s32.totalorder %s75, %s76
      %p90 = scmp.eq.s32.totalorder %s28, 1
      %p91 = por %p89, %p90
      %p93 = scmp.ne.s32.totalorder %s76, %s92
      %p94 = scmp.eq.s32.totalorder %s28, 0
      %p95 = por %p93, %p94
      %s96 = ssub.s32 %s29, %s41
      %p97 = scmp.eq.s32.totalorder %s96, 0
      %s99 = sadd.s32 %s98, 1
      %s100 = scalar_select %p97, %s98, %s99
      %p103 = pneg %p97
      %p104 = scmp.eq.s32.totalorder %s22, 1
      %p105 = por %p103, %p104
      %p106 = scmp.ne.s32.totalorder %s98, %s101
      %p107 = scmp.eq.s32.totalorder %s22, 0
      %p108 = por %p106, %p107
      %p109 = scmp.ne.s32.totalorder %s98, %s101
      %p110 = scmp.eq.s32.totalorder %s27, 1
      %p111 = por %p109, %p110
      %p112 = scmp.ne.s32.totalorder %s101, %s102
      %p113 = scmp.eq.s32.totalorder %s27, 0
      %p114 = por %p112, %p113
      %p115 = scmp.ne.s32.totalorder %s101, %s102
      %p116 = scmp.eq.s32.totalorder %s28, 1
      %p117 = por %p115, %p116
      %p119 = scmp.ne.s32.totalorder %s102, %s118
      %p120 = scmp.eq.s32.totalorder %s28, 0
      %p121 = por %p119, %p120
      %s122 = ssub.s32 %s29, %s41
      %p123 = scmp.eq.s32.totalorder %s122, 0
      %s125 = sadd.s32 %s124, 1
      %s126 = scalar_select %p123, %s124, %s125
      %p129 = pneg %p123
      %p130 = scmp.eq.s32.totalorder %s22, 1
      %p131 = por %p129, %p130
      %p132 = scmp.ne.s32.totalorder %s124, %s127
      %p133 = scmp.eq.s32.totalorder %s22, 0
      %p134 = por %p132, %p133
      %p135 = scmp.ne.s32.totalorder %s124, %s127
      %p136 = scmp.eq.s32.totalorder %s27, 1
      %p137 = por %p135, %p136
      %p138 = scmp.ne.s32.totalorder %s127, %s128
      %p139 = scmp.eq.s32.totalorder %s27, 0
      %p140 = por %p138, %p139
      %p141 = scmp.ne.s32.totalorder %s127, %s128
      %p142 = scmp.eq.s32.totalorder %s28, 1
      %p143 = por %p141, %p142
      %p145 = scmp.ne.s32.totalorder %s128, %s144
      %p146 = scmp.eq.s32.totalorder %s28, 0
      %p147 = por %p145, %p146
      %s148 = ssub.s32 %s29, %s41
      %s149 = ssub.s32 %s30, %s37
      %s150 = sor.u32 %s148, %s149
      %p151 = scmp.eq.s32.totalorder %s150, 0
      %s153 = sadd.s32 %s152, 1
      %s154 = scalar_select %p151, %s152, %s153
      %p157 = pneg %p151
      %p158 = scmp.eq.s32.totalorder %s22, 1
      %p159 = por %p157, %p158
      %p160 = scmp.ne.s32.totalorder %s152, %s155
      %p161 = scmp.eq.s32.totalorder %s22, 0
      %p162 = por %p160, %p161
      %p163 = scmp.ne.s32.totalorder %s152, %s155
      %p164 = scmp.eq.s32.totalorder %s27, 1
      %p165 = por %p163, %p164
      %p166 = scmp.ne.s32.totalorder %s155, %s156
      %p167 = scmp.eq.s32.totalorder %s27, 0
      %p168 = por %p166, %p167
      %p169 = scmp.ne.s32.totalorder %s155, %s156
      %p170 = scmp.eq.s32.totalorder %s28, 1
      %p171 = por %p169, %p170
      %p173 = scmp.ne.s32.totalorder %s156, %s172
      %p174 = scmp.eq.s32.totalorder %s28, 0
      %p175 = por %p173, %p174
      %p176 = scmp.le.s32.totalorder 1, %s22
      %p177 = scmp.lt.s32.totalorder %s22, 3
      %p178 = pnand %p176, %p177
      %p179 = pneg %p178
      // Predicated region
      $region9: #{tpu_custom_call.1} parent=5 // pred_check
        _
      $region10: #{tpu_custom_call.1} parent=5 // pred_check_branch
        %181 = sbr.rel (%p178) target = $region12
      $region11: #{tpu_custom_call.1} parent=5 // pred_region
        %s182 = ssub.s32 %s22, 1
      $region12: #{tpu_custom_call.1} parent=5 // pred_fallthru
        _
      %p183 = scmp.lt.s32.totalorder %s22, 2
      // Predicated region
      $region13: #{tpu_custom_call.1} parent=5 // pred_check
        %p184 = pneg %p183
      $region14: #{tpu_custom_call.1} parent=5 // pred_check_branch
        %186 = sbr.rel (%p184) target = $region16
      $region15: #{tpu_custom_call.1} parent=5 // pred_region
        // Predicated region
        $region17: #{tpu_custom_call.1} parent=15 // pred_check
          %p187 = pneg %p56
        $region18: #{tpu_custom_call.1} parent=15 // pred_check_branch
          %189 = sbr.rel (%p187) target = $region20
        $region19: #{tpu_custom_call.1} parent=15 // pred_region
          %s190 = sand.u32 %s46, 1
          %s191 = scalar_lea.sflag [#allocation3], %s190
          %s192 = sand.u32 %s46, 1
          %s193 = smul.addr %s192, 4
          %s194 = scalar_lea.vmem [#allocation2], %s193
          %s196 = ssub.s32 64, 64
          %197 = vsyncadd %s191, %s196
          %s198 = sadd.s32 %s30, %s29
          %s199 = smul.addr %s198, 64
          %s200 = scalar_lea.hbm %s0, %s199
          %s202 = sshll.u32 %s194, 4
          %s203 = int_to_ptr.vmem [resolvable:$true] %s202
          %205 = dma.hbm_to_vmem [thread:$0]  %s200, 64, %s203, %s191
        $region20: #{tpu_custom_call.1} parent=15 // pred_fallthru
          _
        // Predicated region
        $region21: #{tpu_custom_call.1} parent=15 // pred_check
          %p206 = pneg %p82
        $region22: #{tpu_custom_call.1} parent=15 // pred_check_branch
          %208 = sbr.rel (%p206) target = $region24
        $region23: #{tpu_custom_call.1} parent=15 // pred_region
          %s209 = sand.u32 %s22, 1
          %s210 = scalar_lea.sflag [#allocation6], %s209
          %s211 = sand.u32 %s72, 1
          %s212 = smul.addr %s211, 16
          %s213 = scalar_lea.vmem [#allocation5], %s212
          %s215 = ssub.s32 256, 256
          %216 = vsyncadd %s210, %s215
          %s217 = smul.addr %s29, 4
          %s218 = smul.addr %s217, 64
          %s219 = scalar_lea.hbm %s1, %s218
          %s220 = sshll.u32 %s213, 4
          %s221 = int_to_ptr.vmem [resolvable:$true] %s220
          %226 = dma.hbm_to_vmem [thread:$0]  %s219, 256, %s221, %s210, 64, 64, 4
        $region24: #{tpu_custom_call.1} parent=15 // pred_fallthru
          _
        // Predicated region
        $region25: #{tpu_custom_call.1} parent=15 // pred_check
          %p227 = pneg %p108
        $region26: #{tpu_custom_call.1} parent=15 // pred_check_branch
          %229 = sbr.rel (%p227) target = $region28
        $region27: #{tpu_custom_call.1} parent=15 // pred_region
          %s230 = sand.u32 %s22, 1
          %s231 = scalar_lea.sflag [#allocation6], %s230
          %s232 = sand.u32 %s98, 1
          %s233 = smul.addr %s232, 16
          %s234 = scalar_lea.vmem [#allocation7], %s233
          %s236 = ssub.s32 256, 256
          %237 = vsyncadd %s231, %s236
          %s238 = smul.addr %s29, 4
          %s239 = smul.addr %s238, 64
          %s240 = scalar_lea.hbm %s2, %s239
          %s241 = sshll.u32 %s234, 4
          %s242 = int_to_ptr.vmem [resolvable:$true] %s241
          %247 = dma.hbm_to_vmem [thread:$0]  %s240, 256, %s242, %s231, 64, 64, 4
        $region28: #{tpu_custom_call.1} parent=15 // pred_fallthru
          _
        // Predicated region
        $region29: #{tpu_custom_call.1} parent=15 // pred_check
          %p248 = pneg %p134
        $region30: #{tpu_custom_call.1} parent=15 // pred_check_branch
          %250 = sbr.rel (%p248) target = $region32
        $region31: #{tpu_custom_call.1} parent=15 // pred_region
          %s251 = sand.u32 %s124, 1
          %s252 = scalar_lea.sflag [#allocation9], %s251
          %s253 = sand.u32 %s124, 1
          %s254 = smul.addr %s253, 16
          %s255 = scalar_lea.vmem [#allocation8], %s254
          %s257 = ssub.s32 256, 256
          %258 = vsyncadd %s252, %s257
          %s259 = smul.addr %s29, 4
          %s260 = smul.addr %s259, 64
          %s261 = scalar_lea.hbm %s3, %s260
          %s262 = sshll.u32 %s255, 4
          %s263 = int_to_ptr.vmem [resolvable:$true] %s262
          %268 = dma.hbm_to_vmem [thread:$0]  %s261, 256, %s263, %s252, 64, 64, 4
        $region32: #{tpu_custom_call.1} parent=15 // pred_fallthru
          _
      $region16: #{tpu_custom_call.1} parent=5 // pred_fallthru
        _
      %p269 = scmp.le.s32.totalorder 1, %s22
      %p270 = scmp.lt.s32.totalorder %s22, 3
      %p271 = pnand %p269, %p270
      %p272 = pneg %p271
      // Predicated region
      $region33: #{tpu_custom_call.1} parent=5 // pred_check
        _
      $region34: #{tpu_custom_call.1} parent=5 // pred_check_branch
        %274 = sbr.rel (%p271) target = $region36
      $region35: #{tpu_custom_call.1} parent=5 // pred_region
        %s275 = ssub.s32 %s22, 1
        %s276 = sand.u32 %s49, 1
        %s277 = scalar_lea.sflag [#allocation3], %s276
        %s278 = sand.u32 %s49, 1
        %s279 = smul.addr %s278, 4
        %s280 = scalar_lea.vmem [#allocation2], %s279
        // Predicated region
        $region37: #{tpu_custom_call.1} parent=35 // pred_check
          %p281 = pneg %p62
        $region38: #{tpu_custom_call.1} parent=35 // pred_check_branch
          %283 = sbr.rel (%p281) target = $region40
        $region39: #{tpu_custom_call.1} parent=35 // pred_region
          %284 = dma.done %s277, 64
        $region40: #{tpu_custom_call.1} parent=35 // pred_fallthru
          _
        %s285 = sand.u32 %s27, 1
        %s286 = scalar_lea.sflag [#allocation6], %s285
        %s287 = sand.u32 %s75, 1
        %s288 = smul.addr %s287, 16
        %s289 = scalar_lea.vmem [#allocation5], %s288
        // Predicated region
        $region41: #{tpu_custom_call.1} parent=35 // pred_check
          %p290 = pneg %p88
        $region42: #{tpu_custom_call.1} parent=35 // pred_check_branch
          %292 = sbr.rel (%p290) target = $region44
        $region43: #{tpu_custom_call.1} parent=35 // pred_region
          %293 = dma.done %s286, 256
        $region44: #{tpu_custom_call.1} parent=35 // pred_fallthru
          _
        %s294 = sand.u32 %s27, 1
        %s295 = scalar_lea.sflag [#allocation6], %s294
        %s296 = sand.u32 %s101, 1
        %s297 = smul.addr %s296, 16
        %s298 = scalar_lea.vmem [#allocation7], %s297
        // Predicated region
        $region45: #{tpu_custom_call.1} parent=35 // pred_check
          %p299 = pneg %p114
        $region46: #{tpu_custom_call.1} parent=35 // pred_check_branch
          %301 = sbr.rel (%p299) target = $region48
        $region47: #{tpu_custom_call.1} parent=35 // pred_region
          %302 = dma.done %s295, 256
        $region48: #{tpu_custom_call.1} parent=35 // pred_fallthru
          _
        %s303 = sand.u32 %s127, 1
        %s304 = scalar_lea.sflag [#allocation9], %s303
        %s305 = sand.u32 %s127, 1
        %s306 = smul.addr %s305, 16
        %s307 = scalar_lea.vmem [#allocation8], %s306
        // Predicated region
        $region49: #{tpu_custom_call.1} parent=35 // pred_check
          %p308 = pneg %p140
        $region50: #{tpu_custom_call.1} parent=35 // pred_check_branch
          %310 = sbr.rel (%p308) target = $region52
        $region51: #{tpu_custom_call.1} parent=35 // pred_region
          %311 = dma.done %s304, 256
        $region52: #{tpu_custom_call.1} parent=35 // pred_fallthru
          _
        %s312 = sand.u32 %s49, 1
        %s313 = scalar_lea.sflag [#allocation3], %s312
        %s314 = sand.u32 %s49, 1
        %s315 = smul.addr %s314, 4
        %s316 = scalar_lea.vmem [#allocation2], %s315
        %p317 = pneg %p62
        %p318 = pneg %p59
        %s319 = sand.u32 %s27, 1
        %s320 = scalar_lea.sflag [#allocation6], %s319
        %s321 = sand.u32 %s75, 1
        %s322 = smul.addr %s321, 16
        %s323 = scalar_lea.vmem [#allocation5], %s322
        %p324 = pneg %p88
        %p325 = pneg %p85
        %s326 = sand.u32 %s27, 1
        %s327 = scalar_lea.sflag [#allocation6], %s326
        %s328 = sand.u32 %s101, 1
        %s329 = smul.addr %s328, 16
        %s330 = scalar_lea.vmem [#allocation7], %s329
        %p331 = pneg %p114
        %p332 = pneg %p111
        %s333 = sand.u32 %s127, 1
        %s334 = scalar_lea.sflag [#allocation9], %s333
        %s335 = sand.u32 %s127, 1
        %s336 = smul.addr %s335, 16
        %s337 = scalar_lea.vmem [#allocation8], %s336
        %p338 = pneg %p140
        %p339 = pneg %p137
        %p340 = pneg %p168
        %p341 = pneg %p165
        %s342 = sand.u32 %s155, 1
        %s343 = scalar_lea.sflag [#allocation4], %s342
        %s344 = sand.u32 %s155, 1
        %s345 = smul.addr %s344, 96
        %s346 = scalar_lea.vmem [#allocation10], %s345
        %v348 = vld [vmem:[%s280] sm:$0x1]
        %v349 = vrcp.pop 1.101
        %v350 = vmul.f32 %v348, %v349
        %v351 = vadd.f32 %v350, 0.5
        %vm352 = vcmp.ge.f32.partialorder %v351, 1.0
        %v353 = vsel %vm352, 0.999, %v351
        %vm354 = vcmp.lt.f32.partialorder %v353, 0.0
        %v355 = vsel %vm354, 0.0, %v353
        %v356 = vld [vmem:[%s280 + $0x1] sm:$0x1]
        %v357 = vmul.f32 %v356, %v349
        %v358 = vadd.f32 %v357, 0.5
        %vm359 = vcmp.ge.f32.partialorder %v358, 1.0
        %v360 = vsel %vm359, 0.999, %v358
        %vm361 = vcmp.lt.f32.partialorder %v360, 0.0
        %v362 = vsel %vm361, 0.0, %v360
        %v363 = vld [vmem:[%s280 + $0x2] sm:$0x1]
        %v364 = vmul.f32 %v363, %v349
        %v365 = vadd.f32 %v364, 0.5
        %vm366 = vcmp.ge.f32.partialorder %v365, 1.0
        %v367 = vsel %vm366, 0.999, %v365
        %vm368 = vcmp.lt.f32.partialorder %v367, 0.0
        %v369 = vsel %vm368, 0.0, %v367
        %v370 = vmul.f32 %v355, 7.0
        %v371 = vlaneseq
        %v372 = vshrl.u32 %v371, 7
        %v373 = vcvt.s32.f32 %v372
        %v374 = vlaneseq
        %v375 = vshrl.u32 %v374, 7
        %v376 = vsub.s32 0, %v375
        %v377 = vrot.slane %v370, %v376
        %v378 = vsub.f32 %v373, %v377
        %v379 = vand.u32 2147483647, %v378
        %v380 = vsub.f32 1.0, %v379
        %v381 = vmax.f32 %v380, 0.0
        %v382 = vmul.f32 %v369, 7.0
        %v383 = vlaneseq
        %v384 = vshrl.u32 %v383, 7
        %v385 = vsub.s32 0, %v384
        %v386 = vrot.slane %v382, %v385
        %v387 = vsub.f32 %v373, %v386
        %v388 = vand.u32 2147483647, %v387
        %v389 = vsub.f32 1.0, %v388
        %v390 = vmax.f32 %v389, 0.0
        %v392 = vcombine.high %v390, %v390
        %v394 = vunpack.c.l.s4 1966171168
        %v395 = vunpack.c.0.s8 %v394
        %v396 = vlaneseq
        %v397 = vshrl.u32 %v396, 7
        %v398 = vsub.s32 %v395, %v397
        %v399 = vrot.slane %v390, %v398
        %v401 = vunpack.c.l.s4 1966171168
        %v402 = vunpack.c.0.s8 %v401
        %v403 = vlaneseq
        %v404 = vshrl.u32 %v403, 7
        %v405 = vsub.s32 %v402, %v404
        %v406 = vrot.slane %v392, %v405
        %v407 = vcombine.high %v399, %v399
        %v408 = vcombine.high %v406, %v406
        %v410 = vunpack.c.l.s4 1966171168
        %v411 = vunpack.c.0.s8 %v410
        %v412 = vlaneseq
        %v413 = vshrl.u32 %v412, 7
        %v414 = vsub.s32 %v411, %v413
        %v415 = vrot.slane %v399, %v414
        %v417 = vunpack.c.l.s4 1966171168
        %v418 = vunpack.c.0.s8 %v417
        %v419 = vlaneseq
        %v420 = vshrl.u32 %v419, 7
        %v421 = vsub.s32 %v418, %v420
        %v422 = vrot.slane %v406, %v421
        %v424 = vunpack.c.l.s4 1966171168
        %v425 = vunpack.c.0.s8 %v424
        %v426 = vlaneseq
        %v427 = vshrl.u32 %v426, 7
        %v428 = vsub.s32 %v425, %v427
        %v429 = vrot.slane %v407, %v428
        %v431 = vunpack.c.l.s4 1966171168
        %v432 = vunpack.c.0.s8 %v431
        %v433 = vlaneseq
        %v434 = vshrl.u32 %v433, 7
        %v435 = vsub.s32 %v432, %v434
        %v436 = vrot.slane %v408, %v435
        %v437 = vcombine.high %v415, %v415
        %v438 = vcombine.high %v422, %v422
        %v439 = vcombine.high %v429, %v429
        %v440 = vcombine.high %v436, %v436
        %v441 = vlaneseq
        %v442 = vshrl.u32 %v441, 7
        %v443 = vsub.s32 0, %v442
        %v444 = vrot.slane %v415, %v443
        %v445 = vlaneseq
        %v446 = vshrl.u32 %v445, 7
        %v447 = vsub.s32 0, %v446
        %v448 = vrot.slane %v429, %v447
        %v449 = vlaneseq
        %v450 = vshrl.u32 %v449, 7
        %v451 = vsub.s32 0, %v450
        %v452 = vrot.slane %v437, %v451
        %v453 = vlaneseq
        %v454 = vshrl.u32 %v453, 7
        %v455 = vsub.s32 0, %v454
        %v456 = vrot.slane %v439, %v455
        %v457 = vlaneseq
        %v458 = vshrl.u32 %v457, 7
        %v459 = vsub.s32 0, %v458
        %v460 = vrot.slane %v422, %v459
        %v461 = vlaneseq
        %v462 = vshrl.u32 %v461, 7
        %v463 = vsub.s32 0, %v462
        %v464 = vrot.slane %v436, %v463
        %v465 = vlaneseq
        %v466 = vshrl.u32 %v465, 7
        %v467 = vsub.s32 0, %v466
        %v468 = vrot.slane %v438, %v467
        %v469 = vlaneseq
        %v470 = vshrl.u32 %v469, 7
        %v471 = vsub.s32 0, %v470
        %v472 = vrot.slane %v440, %v471
        %v481 = vmul.f32 %v444, %v381
        %v482 = vmul.f32 %v448, %v381
        %v483 = vmul.f32 %v452, %v381
        %v484 = vmul.f32 %v456, %v381
        %v485 = vmul.f32 %v460, %v381
        %v486 = vmul.f32 %v464, %v381
        %v487 = vmul.f32 %v468, %v381
        %v488 = vmul.f32 %v472, %v381
        %v489 = vld [vmem:[%s289] sm:$0xf]
        %v490 = vld [vmem:[%s289 + $0x4] sm:$0xf]
        %v491 = vld [vmem:[%s289 + $0x8] sm:$0xf]
        %v492 = vld [vmem:[%s289 + $0xc] sm:$0xf]
        %v493 = vpack.c.bf16 %v482, %v481
        %v494 = vpack.c.bf16 %v484, %v483
        %v495 = vpack.c.bf16 %v486, %v485
        %v496 = vpack.c.bf16 %v488, %v487
        %v501 = vunpack.c.l.b16 %v489
        %v502 = vunpack.c.l.b16 %v490
        %v503 = vunpack.c.l.b16 %v491
        %v504 = vunpack.c.l.b16 %v492
        %v505 = vpack.c.b16 %v502, %v501
        %v506 = vpack.c.b16 %v504, %v503
        %vm507 = vcmask 523264
        %v509 = vsel %vm507, %v505, 0
        %v512 = vsel %vm507, %v506, 0
        %514 = vmatprep.subr.bf16.mxu0 0
        %515 = vmatpush1.bf16.msra.mxu0 %v493
        %516 = vmatprep.subr.bf16.mxu0 0
        %517 = vmatpush1.bf16.msra.mxu0 %v494
        %518 = vmatprep.subr.bf16.mxu0 0
        %519 = vmatpush1.bf16.msra.mxu0 %v495
        %520 = vmatprep.subr.bf16.mxu0 0
        %521 = vmatpush1.bf16.msra.mxu0 %v496
        %522 = vmatprep.subr.bf16.mxu0 0
        %523 = vmatpush1.bf16.msra.mxu0 0
        %524 = vmatprep.subr.bf16.mxu0 0
        %525 = vmatpush1.bf16.msra.mxu0 0
        %526 = vmatprep.subr.bf16.mxu0 0
        %527 = vmatpush1.bf16.msra.mxu0 0
        %528 = vmatprep.subr.bf16.mxu0 0
        %529 = vmatpush1.bf16.msra.mxu0 0
        %530 = vmatprep.subr.bf16.mxu0 0
        %531 = vmatpush1.bf16.msra.mxu0 0
        %532 = vmatprep.subr.bf16.mxu0 0
        %533 = vmatpush1.bf16.msra.mxu0 0
        %534 = vmatprep.subr.bf16.mxu0 0
        %535 = vmatpush1.bf16.msra.mxu0 0
        %536 = vmatprep.subr.bf16.mxu0 0
        %537 = vmatpush1.bf16.msra.mxu0 0
        %538 = vmatprep.subr.bf16.mxu0 0
        %539 = vmatpush1.bf16.msra.mxu0 0
        %540 = vmatprep.subr.bf16.mxu0 0
        %541 = vmatpush1.bf16.msra.mxu0 0
        %542 = vmatprep.subr.bf16.mxu0 0
        %543 = vmatpush1.bf16.msra.mxu0 0
        %544 = vmatprep.subr.bf16.mxu0 0
        %545 = vmatpush1.bf16.msra.mxu0 0
        %546 = vmatprep.mubr.bf16.mxu0 0
        %547 = vmatmul.mubr.bf16.gmra.mrb[0].mxu0 %v509
        %v548 = vpop.f32.mrb[0].mxu0
        %v549 = vadd.f32 0.0, %v548
        %v550 = vpop.f32.mrb[0].mxu0
        %v551 = vpop.f32.mrb[0].mxu0
        %v552 = vadd.f32 0.0, %v551
        %v553 = vpop.f32.mrb[0].mxu0
        %554 = vmatprep.mubr.bf16.mxu0 0
        %555 = vmatmul.mubr.bf16.gmra.mrb[0].mxu0 %v512
        %v556 = vpop.f32.mrb[0].mxu0
        %v557 = vadd.f32 0.0, %v556
        %v558 = vpop.f32.mrb[0].mxu0
        %v559 = vpop.f32.mrb[0].mxu0
        %v560 = vadd.f32 0.0, %v559
        %v561 = vpop.f32.mrb[0].mxu0
        %562 = vdwg.mxu0
        %563 = vst.msk [vmem:[%s346] sm:$0xff] %vm507, %v549
        %564 = vst.msk [vmem:[%s346 + $0x8] sm:$0xff] %vm507, %v552
        %565 = vst.msk [vmem:[%s346 + $0x10] sm:$0xff] %vm507, %v557
        %566 = vst.msk [vmem:[%s346 + $0x18] sm:$0xff] %vm507, %v560
        %v567 = vmul.f32 %v362, 7.0
        %v568 = vlaneseq
        %v569 = vshrl.u32 %v568, 7
        %v570 = vsub.s32 0, %v569
        %v571 = vrot.slane %v567, %v570
        %v572 = vsub.f32 %v373, %v571
        %v573 = vand.u32 2147483647, %v572
        %v574 = vsub.f32 1.0, %v573
        %v575 = vmax.f32 %v574, 0.0
        %v577 = vcombine.high %v575, %v575
        %v579 = vunpack.c.l.s4 1966171168
        %v580 = vunpack.c.0.s8 %v579
        %v581 = vlaneseq
        %v582 = vshrl.u32 %v581, 7
        %v583 = vsub.s32 %v580, %v582
        %v584 = vrot.slane %v575, %v583
        %v586 = vunpack.c.l.s4 1966171168
        %v587 = vunpack.c.0.s8 %v586
        %v588 = vlaneseq
        %v589 = vshrl.u32 %v588, 7
        %v590 = vsub.s32 %v587, %v589
        %v591 = vrot.slane %v577, %v590
        %v592 = vcombine.high %v584, %v584
        %v593 = vcombine.high %v591, %v591
        %v595 = vunpack.c.l.s4 1966171168
        %v596 = vunpack.c.0.s8 %v595
        %v597 = vlaneseq
        %v598 = vshrl.u32 %v597, 7
        %v599 = vsub.s32 %v596, %v598
        %v600 = vrot.slane %v584, %v599
        %v602 = vunpack.c.l.s4 1966171168
        %v603 = vunpack.c.0.s8 %v602
        %v604 = vlaneseq
        %v605 = vshrl.u32 %v604, 7
        %v606 = vsub.s32 %v603, %v605
        %v607 = vrot.slane %v591, %v606
        %v609 = vunpack.c.l.s4 1966171168
        %v610 = vunpack.c.0.s8 %v609
        %v611 = vlaneseq
        %v612 = vshrl.u32 %v611, 7
        %v613 = vsub.s32 %v610, %v612
        %v614 = vrot.slane %v592, %v613
        %v616 = vunpack.c.l.s4 1966171168
        %v617 = vunpack.c.0.s8 %v616
        %v618 = vlaneseq
        %v619 = vshrl.u32 %v618, 7
        %v620 = vsub.s32 %v617, %v619
        %v621 = vrot.slane %v593, %v620
        %v622 = vcombine.high %v600, %v600
        %v623 = vcombine.high %v607, %v607
        %v624 = vcombine.high %v614, %v614
        %v625 = vcombine.high %v621, %v621
        %v626 = vlaneseq
        %v627 = vshrl.u32 %v626, 7
        %v628 = vsub.s32 0, %v627
        %v629 = vrot.slane %v600, %v628
        %v630 = vlaneseq
        %v631 = vshrl.u32 %v630, 7
        %v632 = vsub.s32 0, %v631
        %v633 = vrot.slane %v614, %v632
        %v634 = vlaneseq
        %v635 = vshrl.u32 %v634, 7
        %v636 = vsub.s32 0, %v635
        %v637 = vrot.slane %v622, %v636
        %v638 = vlaneseq
        %v639 = vshrl.u32 %v638, 7
        %v640 = vsub.s32 0, %v639
        %v641 = vrot.slane %v624, %v640
        %v642 = vlaneseq
        %v643 = vshrl.u32 %v642, 7
        %v644 = vsub.s32 0, %v643
        %v645 = vrot.slane %v607, %v644
        %v646 = vlaneseq
        %v647 = vshrl.u32 %v646, 7
        %v648 = vsub.s32 0, %v647
        %v649 = vrot.slane %v621, %v648
        %v650 = vlaneseq
        %v651 = vshrl.u32 %v650, 7
        %v652 = vsub.s32 0, %v651
        %v653 = vrot.slane %v623, %v652
        %v654 = vlaneseq
        %v655 = vshrl.u32 %v654, 7
        %v656 = vsub.s32 0, %v655
        %v657 = vrot.slane %v625, %v656
        %v666 = vmul.f32 %v629, %v381
        %v667 = vmul.f32 %v633, %v381
        %v668 = vmul.f32 %v637, %v381
        %v669 = vmul.f32 %v641, %v381
        %v670 = vmul.f32 %v645, %v381
        %v671 = vmul.f32 %v649, %v381
        %v672 = vmul.f32 %v653, %v381
        %v673 = vmul.f32 %v657, %v381
        %v674 = vld [vmem:[%s298] sm:$0xf]
        %v675 = vld [vmem:[%s298 + $0x4] sm:$0xf]
        %v676 = vld [vmem:[%s298 + $0x8] sm:$0xf]
        %v677 = vld [vmem:[%s298 + $0xc] sm:$0xf]
        %v678 = vpack.c.bf16 %v667, %v666
        %v679 = vpack.c.bf16 %v669, %v668
        %v680 = vpack.c.bf16 %v671, %v670
        %v681 = vpack.c.bf16 %v673, %v672
        %v686 = vunpack.c.l.b16 %v674
        %v687 = vunpack.c.l.b16 %v675
        %v688 = vunpack.c.l.b16 %v676
        %v689 = vunpack.c.l.b16 %v677
        %v690 = vpack.c.b16 %v687, %v686
        %v691 = vpack.c.b16 %v689, %v688
        %v693 = vsel %vm507, %v690, 0
        %v696 = vsel %vm507, %v691, 0
        %698 = vmatprep.subr.bf16.mxu0 0
        %699 = vmatpush1.bf16.msra.mxu0 %v678
        %700 = vmatprep.subr.bf16.mxu0 0
        %701 = vmatpush1.bf16.msra.mxu0 %v679
        %702 = vmatprep.subr.bf16.mxu0 0
        %703 = vmatpush1.bf16.msra.mxu0 %v680
        %704 = vmatprep.subr.bf16.mxu0 0
        %705 = vmatpush1.bf16.msra.mxu0 %v681
        %706 = vmatprep.subr.bf16.mxu0 0
        %707 = vmatpush1.bf16.msra.mxu0 0
        %708 = vmatprep.subr.bf16.mxu0 0
        %709 = vmatpush1.bf16.msra.mxu0 0
        %710 = vmatprep.subr.bf16.mxu0 0
        %711 = vmatpush1.bf16.msra.mxu0 0
        %712 = vmatprep.subr.bf16.mxu0 0
        %713 = vmatpush1.bf16.msra.mxu0 0
        %714 = vmatprep.subr.bf16.mxu0 0
        %715 = vmatpush1.bf16.msra.mxu0 0
        %716 = vmatprep.subr.bf16.mxu0 0
        %717 = vmatpush1.bf16.msra.mxu0 0
        %718 = vmatprep.subr.bf16.mxu0 0
        %719 = vmatpush1.bf16.msra.mxu0 0
        %720 = vmatprep.subr.bf16.mxu0 0
        %721 = vmatpush1.bf16.msra.mxu0 0
        %722 = vmatprep.subr.bf16.mxu0 0
        %723 = vmatpush1.bf16.msra.mxu0 0
        %724 = vmatprep.subr.bf16.mxu0 0
        %725 = vmatpush1.bf16.msra.mxu0 0
        %726 = vmatprep.subr.bf16.mxu0 0
        %727 = vmatpush1.bf16.msra.mxu0 0
        %728 = vmatprep.subr.bf16.mxu0 0
        %729 = vmatpush1.bf16.msra.mxu0 0
        %730 = vmatprep.mubr.bf16.mxu0 0
        %731 = vmatmul.mubr.bf16.gmra.mrb[0].mxu0 %v693
        %v732 = vpop.f32.mrb[0].mxu0
        %v733 = vadd.f32 0.0, %v732
        %v734 = vpop.f32.mrb[0].mxu0
        %v735 = vpop.f32.mrb[0].mxu0
        %v736 = vadd.f32 0.0, %v735
        %v737 = vpop.f32.mrb[0].mxu0
        %738 = vmatprep.mubr.bf16.mxu0 0
        %739 = vmatmul.mubr.bf16.gmra.mrb[0].mxu0 %v696
        %v740 = vpop.f32.mrb[0].mxu0
        %v741 = vadd.f32 0.0, %v740
        %v742 = vpop.f32.mrb[0].mxu0
        %v743 = vpop.f32.mrb[0].mxu0
        %v744 = vadd.f32 0.0, %v743
        %v745 = vpop.f32.mrb[0].mxu0
        %746 = vdwg.mxu0
        %747 = vst.msk [vmem:[%s346 + $0x20] sm:$0xff] %vm507, %v733
        %748 = vst.msk [vmem:[%s346 + $0x28] sm:$0xff] %vm507, %v736
        %749 = vst.msk [vmem:[%s346 + $0x30] sm:$0xff] %vm507, %v741
        %750 = vst.msk [vmem:[%s346 + $0x38] sm:$0xff] %vm507, %v744
        %v751 = vmul.f32 %v444, %v575
        %v752 = vmul.f32 %v448, %v575
        %v753 = vmul.f32 %v452, %v575
        %v754 = vmul.f32 %v456, %v575
        %v755 = vmul.f32 %v460, %v575
        %v756 = vmul.f32 %v464, %v575
        %v757 = vmul.f32 %v468, %v575
        %v758 = vmul.f32 %v472, %v575
        %v759 = vld [vmem:[%s307] sm:$0xf]
        %v760 = vld [vmem:[%s307 + $0x4] sm:$0xf]
        %v761 = vld [vmem:[%s307 + $0x8] sm:$0xf]
        %v762 = vld [vmem:[%s307 + $0xc] sm:$0xf]
        %v763 = vpack.c.bf16 %v752, %v751
        %v764 = vpack.c.bf16 %v754, %v753
        %v765 = vpack.c.bf16 %v756, %v755
        %v766 = vpack.c.bf16 %v758, %v757
        %v771 = vunpack.c.l.b16 %v759
        %v772 = vunpack.c.l.b16 %v760
        %v773 = vunpack.c.l.b16 %v761
        %v774 = vunpack.c.l.b16 %v762
        %v775 = vpack.c.b16 %v772, %v771
        %v776 = vpack.c.b16 %v774, %v773
        %v778 = vsel %vm507, %v775, 0
        %v781 = vsel %vm507, %v776, 0
        %783 = vmatprep.subr.bf16.mxu0 0
        %784 = vmatpush1.bf16.msra.mxu0 %v763
        %785 = vmatprep.subr.bf16.mxu0 0
        %786 = vmatpush1.bf16.msra.mxu0 %v764
        %787 = vmatprep.subr.bf16.mxu0 0
        %788 = vmatpush1.bf16.msra.mxu0 %v765
        %789 = vmatprep.subr.bf16.mxu0 0
        %790 = vmatpush1.bf16.msra.mxu0 %v766
        %791 = vmatprep.subr.bf16.mxu0 0
        %792 = vmatpush1.bf16.msra.mxu0 0
        %793 = vmatprep.subr.bf16.mxu0 0
        %794 = vmatpush1.bf16.msra.mxu0 0
        %795 = vmatprep.subr.bf16.mxu0 0
        %796 = vmatpush1.bf16.msra.mxu0 0
        %797 = vmatprep.subr.bf16.mxu0 0
        %798 = vmatpush1.bf16.msra.mxu0 0
        %799 = vmatprep.subr.bf16.mxu0 0
        %800 = vmatpush1.bf16.msra.mxu0 0
        %801 = vmatprep.subr.bf16.mxu0 0
        %802 = vmatpush1.bf16.msra.mxu0 0
        %803 = vmatprep.subr.bf16.mxu0 0
        %804 = vmatpush1.bf16.msra.mxu0 0
        %805 = vmatprep.subr.bf16.mxu0 0
        %806 = vmatpush1.bf16.msra.mxu0 0
        %807 = vmatprep.subr.bf16.mxu0 0
        %808 = vmatpush1.bf16.msra.mxu0 0
        %809 = vmatprep.subr.bf16.mxu0 0
        %810 = vmatpush1.bf16.msra.mxu0 0
        %811 = vmatprep.subr.bf16.mxu0 0
        %812 = vmatpush1.bf16.msra.mxu0 0
        %813 = vmatprep.subr.bf16.mxu0 0
        %814 = vmatpush1.bf16.msra.mxu0 0
        %815 = vmatprep.mubr.bf16.mxu0 0
        %816 = vmatmul.mubr.bf16.gmra.mrb[0].mxu0 %v778
        %v817 = vpop.f32.mrb[0].mxu0
        %v818 = vadd.f32 0.0, %v817
        %v819 = vpop.f32.mrb[0].mxu0
        %v820 = vpop.f32.mrb[0].mxu0
        %v821 = vadd.f32 0.0, %v820
        %v822 = vpop.f32.mrb[0].mxu0
        %823 = vmatprep.mubr.bf16.mxu0 0
        %824 = vmatmul.mubr.bf16.gmra.mrb[0].mxu0 %v781
        %v825 = vpop.f32.mrb[0].mxu0
        %v826 = vadd.f32 0.0, %v825
        %v827 = vpop.f32.mrb[0].mxu0
        %v828 = vpop.f32.mrb[0].mxu0
        %v829 = vadd.f32 0.0, %v828
        %v830 = vpop.f32.mrb[0].mxu0
        %831 = vdwg.mxu0
        %832 = vst.msk [vmem:[%s346 + $0x40] sm:$0xff] %vm507, %v818
        %833 = vst.msk [vmem:[%s346 + $0x48] sm:$0xff] %vm507, %v821
        %834 = vst.msk [vmem:[%s346 + $0x50] sm:$0xff] %vm507, %v826
        %835 = vst.msk [vmem:[%s346 + $0x58] sm:$0xff] %vm507, %v829
        %s836 = sand.u32 %s155, 1
        %s837 = scalar_lea.sflag [#allocation4], %s836
        %s838 = sand.u32 %s155, 1
        %s839 = smul.addr %s838, 96
        %s840 = scalar_lea.vmem [#allocation10], %s839
        // Predicated region
        $region53: #{tpu_custom_call.1} parent=35 // pred_check
          %p841 = pneg %p165
        $region54: #{tpu_custom_call.1} parent=35 // pred_check_branch
          %843 = sbr.rel (%p841) target = $region56
        $region55: #{tpu_custom_call.1} parent=35 // pred_region
          %s845 = ssub.s32 1536, 1536
          %846 = vsyncadd %s837, %s845
          %s847 = smul.addr %s31, 12
          %s848 = sadd.s32 %s32, %s847
          %s849 = smul.addr %s848, 128
          %s850 = scalar_lea.hbm %s4, %s849
          %s851 = sshll.u32 %s840, 4
          %s852 = int_to_ptr.vmem [resolvable:$true] %s851
          %857 = dma.vmem_to_hbm [thread:$0]  %s852, 1536, %s850, %s837, 128, 128, 8
        $region56: #{tpu_custom_call.1} parent=35 // pred_fallthru
          _
      $region36: #{tpu_custom_call.1} parent=5 // pred_fallthru
        _
      %p858 = scmp.le.s32.totalorder 2, %s22
      // Predicated region
      $region57: #{tpu_custom_call.1} parent=5 // pred_check
        %p859 = pneg %p858
      $region58: #{tpu_custom_call.1} parent=5 // pred_check_branch
        %861 = sbr.rel (%p859) target = $region60
      $region59: #{tpu_custom_call.1} parent=5 // pred_region
        %s862 = ssub.s32 %s22, 2
        // Predicated region
        $region61: #{tpu_custom_call.1} parent=59 // pred_check
          %p863 = pneg %p171
        $region62: #{tpu_custom_call.1} parent=59 // pred_check_branch
          %865 = sbr.rel (%p863) target = $region64
        $region63: #{tpu_custom_call.1} parent=59 // pred_region
          %s866 = sand.u32 %s156, 1
          %s867 = scalar_lea.sflag [#allocation4], %s866
          %s868 = sand.u32 %s156, 1
          %s869 = smul.addr %s868, 96
          %s870 = scalar_lea.vmem [#allocation10], %s869
          %871 = dma.done %s867, 1536
        $region64: #{tpu_custom_call.1} parent=59 // pred_fallthru
          _
      $region60: #{tpu_custom_call.1} parent=5 // pred_fallthru
        _
    $region6: #{tpu_custom_call.1} parent=1 // loop_footer
      %s26 = sadd.s32 1, %s22
    $region7: #{tpu_custom_call.1} parent=1 // loop_footer_branch
      %21 = sbr.rel target = $region3
    $region8: #{tpu_custom_call.1} parent=1 // loop_exit
      _
    %872 = vsyncpa [#allocation3], 1
    %s873 = scalar_lea.sflag [#allocation3], 1
    %874 = vsyncpa %s873, 1
    %875 = vsyncpa [#allocation6], 1
    %s876 = scalar_lea.sflag [#allocation6], 1
    %877 = vsyncpa %s876, 1
    %878 = vsyncpa [#allocation9], 1
    %s879 = scalar_lea.sflag [#allocation9], 1
    %880 = vsyncpa %s879, 1
    %881 = vsyncpa [#allocation4], 1
    %s882 = scalar_lea.sflag [#allocation4], 1
    %883 = vsyncpa %s882, 1

</llo_original>
